<compile_context>
chip_gen: v5e
topology: v5e:2x2
jax: 0.10.0
libtpu: 0.0.40
codegen_flags: <defaults>
</compile_context>

<pallas_src>
import functools

import jax
import jax.numpy as jnp
from jax.experimental import pallas as pl
from jax.experimental.pallas import tpu as pltpu


def _round_up(x, m):
    return ((x + m - 1) // m) * m


def _pick_tile(n, max_t=2048):
    """Largest multiple-of-128 divisor of n that is <= max_t (None if none)."""
    best = None
    t = 128
    limit = min(n, max_t)
    while t <= limit:
        if n % t == 0:
            best = t
        t += 128
    return best


def _split_cols(m, max_t=2048):
    """(n_parallel, lane tile) for the RPN loss grid; n_parallel=2 for v7x."""
    n_par = 2 if (m % 256 == 0 and m >= 256) else 1
    tm = _pick_tile(m // n_par, max_t)
    if tm is None:
        return 1, None
    return n_par, tm


def _pick_row_tile(n, cap=1024):
    """n is a multiple of 8; largest multiple-of-8 divisor of n that is <= cap."""
    if n <= cap:
        return n
    t = (cap // 8) * 8
    while t >= 8:
        if n % t == 0:
            return t
        t -= 8
    return n


# ----------------------------------------------------------------------------
# Fused backbone (1x1 conv + ReLU) + RPN heads + fg softmax + pooled features
# Channel-major: input (NB, C, HW); slab output (32, NB*HW); pooled (NB, F, 1).
# ----------------------------------------------------------------------------

def _backbone_rpn_kernel(x_ref, wf_ref, bf_ref, wh_ref, bh_ref,
                         slab_ref, pool_ref, *, num_anchors):
    A = num_anchors
    j = pl.program_id(1)
    in_ch = x_ref.shape[0]
    tm = x_ref.shape[1]
    slab_h = slab_ref.shape[0]

    x = x_ref[...]                                    # (in_ch, tm) f32
    # backbone stand-in: 1x1 conv + relu as in_ch rank-1 VPU updates (no
    # transpose, no channel padding -- the channel axis never hits the MXU).
    featT = bf_ref[...] + wf_ref[:, 0:1] * x[0:1, :]
    for c in range(1, in_ch):
        featT = featT + wf_ref[:, c:c + 1] * x[c:c + 1, :]
    featT = jnp.maximum(featT, 0.0)                   # (feat_ch, tm) f32

    # fused RPN heads: rows [bg(A) | fg(A) | loc(4A)]  (bf16 MXU, f32 acc)
    headsT = jnp.dot(wh_ref[...], featT.astype(wh_ref.dtype),
                     preferred_element_type=jnp.float32) + bh_ref[...]
    bg = headsT[0:A, :]
    fg = headsT[A:2 * A, :]
    m = jnp.maximum(bg, fg)
    ebg = jnp.exp(bg - m)
    efg = jnp.exp(fg - m)
    p_fg = efg / (ebg + efg)                          # exact; p_bg = 1 - p_fg

    # single full-width, lane-dense store of the whole (slab_h, tm) tile
    pieces = [headsT, p_fg]
    pad_rows = slab_h - 7 * A
    if pad_rows > 0:
        pieces.append(jnp.zeros((pad_rows, tm), jnp.float32))
    slab_ref[...] = jnp.concatenate(pieces, axis=0)

    # fused per-image pooled feature sum (RoI-feature stand-in) -- the full
    # feature map never goes to HBM.
    @pl.when(j == 0)
    def _():
        pool_ref[...] = jnp.zeros_like(pool_ref)
    pool_ref[...] += jnp.sum(featT, axis=1, keepdims=True)


def backbone_rpn(x_cm, w_feat, b_feat, w_headsT, b_headsT, num_anchors,
                 slab_h, max_hw_tile=2048):
    NB, cin, hwp = x_cm.shape
    feat_ch = w_feat.shape[0]
    head_rows = w_headsT.shape[0]
    tm = _pick_tile(hwp, max_hw_tile)
    if tm is None:                                     # hwp padded to 128 mult
        tm = hwp
    n_hw = hwp // tm
    slab, pooled = pl.pallas_call(
        functools.partial(_backbone_rpn_kernel, num_anchors=num_anchors),
        out_shape=(jax.ShapeDtypeStruct((slab_h, NB * hwp), jnp.float32),
                   jax.ShapeDtypeStruct((NB, feat_ch, 1), jnp.float32)),
        grid=(NB, n_hw),
        in_specs=[pl.BlockSpec((None, cin, tm), lambda b, j: (b, 0, j)),
                  pl.BlockSpec((feat_ch, cin), lambda b, j: (0, 0)),
                  pl.BlockSpec((feat_ch, 1), lambda b, j: (0, 0)),
                  pl.BlockSpec((head_rows, feat_ch), lambda b, j: (0, 0)),
                  pl.BlockSpec((head_rows, 1), lambda b, j: (0, 0))],
        out_specs=(pl.BlockSpec((slab_h, tm), lambda b, j: (0, b * n_hw + j)),
                   pl.BlockSpec((None, feat_ch, 1), lambda b, j: (b, 0, 0))),
        compiler_params=pltpu.CompilerParams(
            dimension_semantics=("parallel", "arbitrary")),
    )(x_cm, w_feat, b_feat, w_headsT, b_headsT)
    return slab, pooled[:, :, 0]                       # (slab_h, NB*hwp), (NB, F)


# ----------------------------------------------------------------------------
# Fused RCNN fc + cls/loc heads + class softmax (row-major, lane-dense slab)
# ----------------------------------------------------------------------------

def _rcnn_heads_kernel(x_ref, wfc_ref, bfc_ref, wh_ref, bh_ref, o_ref, *,
                       num_classes):
    C = num_classes
    fc_dim = wfc_ref.shape[1]
    slab_w = o_ref.shape[1]
    tm = x_ref.shape[0]

    fea = jnp.dot(x_ref[...].astype(wfc_ref.dtype), wfc_ref[...],
                  preferred_element_type=jnp.float32) + bfc_ref[...]
    fea = jnp.maximum(fea, 0.0)                       # (tm, fc_dim)
    heads = jnp.dot(fea.astype(wh_ref.dtype), wh_ref[...],
                    preferred_element_type=jnp.float32) + bh_ref[...]
    cls = heads[:, 0:C]
    m = jnp.max(cls, axis=1, keepdims=True)
    e = jnp.exp(cls - m)
    probs = e / jnp.sum(e, axis=1, keepdims=True)     # exact softmax

    # build the whole (tm, slab_w) tile in-register, one store
    pieces = [fea, heads[:, 0:5 * C], probs]
    pad_w = slab_w - (fc_dim + 6 * C)
    if pad_w > 0:
        pieces.append(jnp.zeros((tm, pad_w), jnp.float32))
    o_ref[...] = jnp.concatenate(pieces, axis=1)


def rcnn_heads(roi_feat, w_fc, b_fc, w_heads, b_heads, num_classes, slab_w,
               row_tile):
    Rp, k = roi_feat.shape
    fc_dim = w_fc.shape[1]
    hw_ = w_heads.shape[1]
    out = pl.pallas_call(
        functools.partial(_rcnn_heads_kernel, num_classes=num_classes),
        out_shape=jax.ShapeDtypeStruct((Rp, slab_w), jnp.float32),
        grid=(Rp // row_tile,),
        in_specs=[pl.BlockSpec((row_tile, k), lambda i: (i, 0)),
                  pl.BlockSpec((k, fc_dim), lambda i: (0, 0)),
                  pl.BlockSpec((1, fc_dim), lambda i: (0, 0)),
                  pl.BlockSpec((fc_dim, hw_), lambda i: (0, 0)),
                  pl.BlockSpec((1, hw_), lambda i: (0, 0))],
        out_specs=pl.BlockSpec((row_tile, slab_w), lambda i: (i, 0)),
        compiler_params=pltpu.CompilerParams(
            dimension_semantics=("parallel",)),
    )(roi_feat, w_fc, b_fc, w_heads, b_heads)
    return out


# ----------------------------------------------------------------------------
# Fused loss kernels: cross-entropy + accuracy + smooth-L1.
# Both read the head slabs directly (no wrapper slicing) plus ONE packed
# target array, accumulate in VMEM scratch, and store once at the last step.
# ----------------------------------------------------------------------------

def _smooth_l1_tile(pred, weight, tgt, sigma2):
    # matches the reference exactly: smooth_l1(pred*weight - tgt); the target
    # is intentionally NOT masked (same as the PyTorch module).
    diff = pred * weight - tgt
    ad = jnp.abs(diff)
    sgn = (ad < 1.0 / sigma2).astype(jnp.float32)
    return diff * diff * (sigma2 * 0.5) * sgn + (ad - 0.5 / sigma2) * (1.0 - sgn)


def _rpn_loss_kernel(slab_ref, tgt_ref, o_ref, acc_ref, *, num_anchors, sigma2):
    A = num_anchors
    j = pl.program_id(1)

    @pl.when(j == 0)
    def _():
        acc_ref[...] = jnp.zeros_like(acc_ref)

    slab = slab_ref[...]                              # (slab_h, tm)
    tgt = tgt_ref[...]                                # (tgt_h, tm)
    bg = slab[0:A, :]
    fg = slab[A:2 * A, :]
    loc = slab[2 * A:6 * A, :]
    t = tgt[0:A, :]                                   # f32 in {-1, 0, 1}
    loc_t = tgt[A:5 * A, :]
    loc_m = tgt[5 * A:9 * A, :]

    valid = t != -1.0
    vf = valid.astype(jnp.float32)
    # pairwise 2-class cross-entropy (ignore_index = -1)
    m = jnp.maximum(bg, fg)
    lse = m + jnp.log(jnp.exp(bg - m) + jnp.exp(fg - m))
    chosen = jnp.where(t == 1.0, fg, bg)
    ce = (lse - chosen) * vf
    # accuracy (top-1); ties -> class 0 (bg), matching torch.topk convention
    pred_fg = (fg > bg).astype(jnp.float32)
    corr = jnp.logical_and(pred_fg == t, valid).astype(jnp.float32)
    sl1 = _smooth_l1_tile(loc, loc_m, loc_t, sigma2)

    acc_ref[...] += jnp.concatenate(
        [jnp.sum(ce, axis=0, keepdims=True),
         jnp.sum(corr, axis=0, keepdims=True),
         jnp.sum(vf, axis=0, keepdims=True),
         jnp.sum(sl1, axis=0, keepdims=True)], axis=0)

    @pl.when(j == pl.num_programs(1) - 1)
    def _():
        o_ref[...] = jnp.sum(acc_ref[...], axis=1, keepdims=True)


def rpn_losses(slab, tgt_packed, num_anchors, sigma=3.0):
    SH = slab.shape[0]
    TH, M = tgt_packed.shape
    n_par, tm = _split_cols(M)
    if tm is None:
        # fallback (only if M has no multiple-of-128 divisor): slice source half
        slab = slab[:, :M]
        n_par, tm, nj = 1, M, 1
    else:
        nj = M // (n_par * tm)
    out = pl.pallas_call(
        functools.partial(_rpn_loss_kernel, num_anchors=num_anchors,
                          sigma2=sigma * sigma),
        out_shape=jax.ShapeDtypeStruct((n_par, 4, 1), jnp.float32),
        grid=(n_par, nj),
        in_specs=[pl.BlockSpec((SH, tm), lambda c, j: (0, c * nj + j)),
                  pl.BlockSpec((TH, tm), lambda c, j: (0, c * nj + j))],
        out_specs=pl.BlockSpec((None, 4, 1), lambda c, j: (c, 0, 0)),
        scratch_shapes=[pltpu.VMEM((4, tm), jnp.float32)],
        compiler_params=pltpu.CompilerParams(
            dimension_semantics=("parallel", "arbitrary")),
    )(slab, tgt_packed)
    totals = jnp.sum(out[:, :, 0], axis=0)            # (4,)
    return totals[0], totals[1], totals[2], totals[3]  # ce_sum, corr, cnt, sl1


def _rcnn_loss_kernel(slab_ref, tgt_ref, o_ref, acc_ref, *, num_classes,
                      cls_off, loc_off, sigma2):
    C = num_classes
    i = pl.program_id(0)

    @pl.when(i == 0)
    def _():
        acc_ref[...] = jnp.zeros_like(acc_ref)

    slab = slab_ref[...]                              # (tr, slab_w)
    tgt = tgt_ref[...]                                # (tr, tgt_w)
    logits = slab[:, cls_off:cls_off + C]
    loc = slab[:, loc_off:loc_off + 4 * C]
    t_f = tgt[:, 0:1]
    loc_t = tgt[:, 1:1 + 4 * C]
    loc_w = tgt[:, 1 + 4 * C:1 + 8 * C]

    t_i = t_f.astype(jnp.int32)
    valid = t_f != -1.0
    vf = valid.astype(jnp.float32)
    tr = logits.shape[0]
    col = jax.lax.broadcasted_iota(jnp.int32, (tr, C), 1)
    onehot = (col == t_i).astype(jnp.float32)
    rmax = jnp.max(logits, axis=1, keepdims=True)
    lse = rmax + jnp.log(jnp.sum(jnp.exp(logits - rmax), axis=1, keepdims=True))
    tl = jnp.sum(logits * onehot, axis=1, keepdims=True)
    ce = (lse - tl) * vf
    is_max = logits == rmax
    pred = jnp.min(jnp.where(is_max, col, C), axis=1, keepdims=True)
    corr = jnp.logical_and(pred == t_i, valid).astype(jnp.float32)
    sl1 = jnp.sum(_smooth_l1_tile(loc, loc_w, loc_t, sigma2), axis=1,
                  keepdims=True)

    acc_ref[...] += jnp.concatenate([ce, corr, vf, sl1], axis=1)   # (tr, 4)

    @pl.when(i == pl.num_programs(0) - 1)
    def _():
        o_ref[...] = jnp.sum(acc_ref[...], axis=0, keepdims=True)


def rcnn_losses(slab2, tgt_packed, num_classes, cls_off, loc_off, row_tile,
                sigma=3.0):
    rows, tw = tgt_packed.shape
    slab_w = slab2.shape[1]
    out = pl.pallas_call(
        functools.partial(_rcnn_loss_kernel, num_classes=num_classes,
                          cls_off=cls_off, loc_off=loc_off, sigma2=sigma * sigma),
        out_shape=jax.ShapeDtypeStruct((1, 4), jnp.float32),
        grid=(rows // row_tile,),
        in_specs=[pl.BlockSpec((row_tile, slab_w), lambda i: (i, 0)),
                  pl.BlockSpec((row_tile, tw), lambda i: (i, 0))],
        out_specs=pl.BlockSpec((1, 4), lambda i: (0, 0)),
        scratch_shapes=[pltpu.VMEM((row_tile, 4), jnp.float32)],
        compiler_params=pltpu.CompilerParams(
            dimension_semantics=("arbitrary",)),
    )(slab2, tgt_packed)
    return out[0, 0], out[0, 1], out[0, 2], out[0, 3]


# ----------------------------------------------------------------------------
# Model (glue around the fused Pallas kernels)
# ----------------------------------------------------------------------------

class FasterRCNNAdExPallas:
    def __init__(self, key, in_ch=3, feat_ch=32, num_anchors=4,
                 num_classes=5, fc_dim=32):
        ks = jax.random.split(key, 6)
        s = 0.1
        A, C = num_anchors, num_classes
        self.A = A
        self.num_classes = C
        self.feat_ch = feat_ch
        self.fc_dim = fc_dim
        self.in_ch = in_ch
        self.training = True

        # slab / packed-target geometry
        self.RPN_SLAB_H = _round_up(7 * A, 8)          # [bg|fg|loc|p_fg|pad]
        self.RPN_TGT_H = _round_up(9 * A, 8)           # [cls|loc_t|loc_mask|pad]
        self.RCNN_HEAD_W = _round_up(5 * C, 8)         # [cls|loc|pad]
        self.RCNN_SLAB_W = _round_up(fc_dim + 6 * C, 8)  # [fea|cls|loc|probs|pad]
        self.RCNN_TGT_W = _round_up(1 + 8 * C, 8)      # [cls|loc_t|loc_w|pad]
        self.c_cls = fc_dim
        self.c_loc = fc_dim + C
        self.c_prob = fc_dim + 5 * C

        # backbone 1x1 conv weights, stored output-major (feat_ch, in_ch), f32
        self.w_feat = s * jax.random.normal(ks[0], (feat_ch, in_ch), jnp.float32)
        self.b_feat = jnp.zeros((feat_ch, 1), jnp.float32)

        # fused RPN heads, row layout (transposed): [bg(A) | fg(A) | loc(4A)]
        w_bg = s * jax.random.normal(ks[1], (A, feat_ch), jnp.float32)
        w_fg = s * jax.random.normal(ks[2], (A, feat_ch), jnp.float32)
        w_lc = s * jax.random.normal(ks[3], (4 * A, feat_ch), jnp.float32)
        self.w_rpn_headsT = jnp.concatenate([w_bg, w_fg, w_lc],
                                            axis=0).astype(jnp.bfloat16)
        self.b_rpn_headsT = jnp.zeros((6 * A, 1), jnp.float32)

        # fused RCNN heads, column layout: [cls(C) | loc(4C) | 0-pad]
        self.w_fc = (s * jax.random.normal(ks[4], (feat_ch, fc_dim),
                                           jnp.float32)).astype(jnp.bfloat16)
        self.b_fc = jnp.zeros((1, fc_dim), jnp.float32)
        kc, kl = jax.random.split(ks[5])
        w_cls = s * jax.random.normal(kc, (fc_dim, C), jnp.float32)
        w_loc = s * jax.random.normal(kl, (fc_dim, 4 * C), jnp.float32)
        wr = jnp.zeros((fc_dim, self.RCNN_HEAD_W), jnp.float32)
        wr = wr.at[:, 0:C].set(w_cls)
        wr = wr.at[:, C:5 * C].set(w_loc)
        self.w_rcnn_heads = wr.astype(jnp.bfloat16)
        self.b_rcnn_heads = jnp.zeros((1, self.RCNN_HEAD_W), jnp.float32)

    # ----- layout glue -------------------------------------------------------
    def _to_channel_major(self, x_nchw):
        # free reshape (no transpose, no channel pad); pad the spatial axis to
        # a multiple of 128 only if needed (not triggered at the test shapes).
        nb, c, h, w = x_nchw.shape
        hw = h * w
        hwp = _round_up(hw, 128)
        x = x_nchw.reshape(nb, c, hw)
        if hwp != hw:
            x = jnp.pad(x, ((0, 0), (0, 0), (0, hwp - hw)))
        return x, hwp

    # ----- external target-generation functions (deterministic stand-ins) ---
    def _compute_anchor_targets(self, dims, hwp, key):
        # TODO(synk): compute_anchor_targets (IoU matching / sampling) is
        # external to the module; deterministic synthetic targets, packed
        # channel-major as rows [cls(A)|loc_target(4A)|loc_mask(4A)|pad].
        B, H, W = dims
        hw = H * W
        A = self.A
        M = B * hwp
        k1, k2, k3 = jax.random.split(key, 3)
        cls_t = jax.random.randint(k1, (A, M), -1, 2).astype(jnp.float32)
        loc_t = jax.random.normal(k2, (4 * A, M), jnp.float32)
        loc_m = jax.random.bernoulli(k3, 0.25, (4 * A, M)).astype(jnp.float32)
        if hwp != hw:
            real = ((jnp.arange(M) % hwp) < hw)[None, :]
            cls_t = jnp.where(real, cls_t, -1.0)
            loc_t = jnp.where(real, loc_t, 0.0)
            loc_m = jnp.where(real, loc_m, 0.0)
        loc_norm = jnp.maximum(jnp.sum((cls_t == 1.0).astype(jnp.float32)), 1.0)
        pieces = [cls_t, loc_t, loc_m]
        pad_rows = self.RPN_TGT_H - 9 * A
        if pad_rows > 0:
            pieces.append(jnp.zeros((pad_rows, M), jnp.float32))
        return jnp.concatenate(pieces, axis=0), loc_norm

    def _compute_rpn_proposals(self, slab, dims, num_rois):
        # TODO(synk): compute_rpn_proposals (anchor decode + NMS) is external;
        # deterministic synthetic proposals [batch_idx, x1, y1, x2, y2].
        B, H, W = dims
        r = jnp.arange(num_rois, dtype=jnp.float32)
        batch_idx = (jnp.arange(num_rois) % B).astype(jnp.float32)
        x1 = (r % 4) * 2.0
        y1 = (r % 3) * 2.0
        return jnp.stack([batch_idx, x1, y1, x1 + 6.0, y1 + 6.0], axis=1)

    def _compute_proposal_targets(self, proposals, key):
        # TODO(synk): compute_proposal_targets is external; synthetic targets
        # packed lane-wise as [cls(1) | loc_target(4C) | loc_weight(4C) | pad].
        R = proposals.shape[0]
        C = self.num_classes
        k1, k2, k3 = jax.random.split(key, 3)
        cls_t = jax.random.randint(k1, (R, 1), 0, C).astype(jnp.float32)
        loc_t = jax.random.normal(k2, (R, 4 * C), jnp.float32)
        loc_w = jax.random.bernoulli(k3, 0.5, (R, 4 * C)).astype(jnp.float32)
        pieces = [cls_t, loc_t, loc_w]
        pad_w = self.RCNN_TGT_W - (1 + 8 * C)
        if pad_w > 0:
            pieces.append(jnp.zeros((R, pad_w), jnp.float32))
        return proposals, jnp.concatenate(pieces, axis=1)

    def _pad_rcnn_targets(self, tgt, rows_needed):
        R = tgt.shape[0]
        if rows_needed > R:
            pad_cls = jnp.full((rows_needed - R, 1), -1.0, jnp.float32)
            pad_rest = jnp.zeros((rows_needed - R, tgt.shape[1] - 1),
                                 jnp.float32)
            tgt = jnp.concatenate(
                [tgt, jnp.concatenate([pad_cls, pad_rest], axis=1)], axis=0)
        return tgt

    def _compute_cluster_targets(self, rois, x_fea, n_cluster, threshold):
        # TODO(synk): compute_cluster_targets is external; stand-in assigns
        # rois round-robin to clusters and averages features per cluster.
        R, D = x_fea.shape
        assign = jnp.arange(R) % n_cluster
        onehot = (assign[:, None] == jnp.arange(n_cluster)[None, :]
                  ).astype(jnp.float32)
        counts = jnp.maximum(onehot.sum(axis=0, keepdims=True).T, 1.0)
        centers = (onehot.T @ x_fea) / counts
        return x_fea, centers

    # ----- RoI features (per-image pooled feature computed inside the kernel)
    def _roi_features(self, pooled_mean, rois, batch_offset):
        # TODO(synk): no RoIAlign reference; stand-in uses the per-image global
        # average-pooled feature (fused into the backbone kernel) indexed by
        # the roi batch id.
        roi_b = rois[:, 0].astype(jnp.int32) + batch_offset
        return jnp.take(pooled_mean, roi_b, axis=0)

    # ----- fused kernel invocations ------------------------------------------
    def _run_backbone_rpn(self, x_cm):
        return backbone_rpn(x_cm, self.w_feat, self.b_feat,
                            self.w_rpn_headsT, self.b_rpn_headsT,
                            self.A, self.RPN_SLAB_H)

    def _run_rcnn(self, roi_feat, row_tile):
        return rcnn_heads(roi_feat, self.w_fc, self.b_fc, self.w_rcnn_heads,
                          self.b_rcnn_heads, self.num_classes,
                          self.RCNN_SLAB_W, row_tile)

    # ----- losses (reference math, fused Pallas kernels) ---------------------
    def _add_rpn_loss(self, slab, anchor_packed, loc_normalizer):
        ce_sum, corr, cnt, sl1 = rpn_losses(slab, anchor_packed, self.A)
        # no clamp: all-ignored -> NaN, matching F.cross_entropy(ignore_index)
        rpn_loss_cls = ce_sum / cnt
        rpn_acc = corr * 100.0 / cnt
        rpn_loss_loc = sl1 / loc_normalizer
        return rpn_loss_cls, rpn_loss_loc, rpn_acc

    def _add_rcnn_loss(self, slab2, rcnn_tgt_padded, row_tile, num_targets):
        ce_sum, corr, cnt, sl1 = rcnn_losses(slab2, rcnn_tgt_padded,
                                             self.num_classes, self.c_cls,
                                             self.c_loc, row_tile)
        rcnn_loss_cls = ce_sum / cnt
        rcnn_acc = corr * 100.0 / cnt
        rcnn_loss_loc = sl1 / float(num_targets)
        return rcnn_loss_cls, rcnn_loss_loc, rcnn_acc

    # ----- forward -----------------------------------------------------------
    def forward(self, inputs, target=None, num_rois=16):
        x_input = inputs['image']
        B, C, H, W = x_input.shape
        dims = (B, H, W)
        hw = H * W
        A, NC = self.A, self.num_classes
        outputs = {'losses': [], 'predict': [], 'accuracy': []}

        if self.training:
            assert target is not None and target.shape == x_input.shape
            # ONE fused backbone+RPN launch for source AND gan/target images
            x_all, hwp = self._to_channel_major(
                jnp.concatenate([x_input, target], axis=0))
            slab, pooled_sum = self._run_backbone_rpn(x_all)
            pooled_mean = pooled_sum / float(hw)       # (2B, feat_ch)
            M = B * hwp                                # source columns of slab
            # original: assert x_gan.size() == x.size() -- both halves come
            # from the same fused launch, so they match by construction.

            # RPN loss (fused CE + accuracy + smooth-L1; reads the slab directly)
            anchor_packed, loc_norm = self._compute_anchor_targets(
                dims, hwp, jax.random.PRNGKey(1))
            rpn_loss_cls, rpn_loss_loc, rpn_acc = self._add_rpn_loss(
                slab, anchor_packed, loc_norm)

            # proposals / proposal targets (external stand-ins)
            proposals = self._compute_rpn_proposals(slab, dims, num_rois)
            rois, rcnn_tgt = self._compute_proposal_targets(
                proposals, jax.random.PRNGKey(2))
            assert rois.shape[1] == 5
            proposals_gan = self._compute_rpn_proposals(slab, dims, num_rois)
            proposals_gan = proposals_gan[0:512, :5]
            assert proposals_gan.shape[1] == 5

            # one fused RCNN launch for source AND gan RoIs
            roi_feat_src = self._roi_features(pooled_mean, rois, 0)
            roi_feat_gan = self._roi_features(pooled_mean, proposals_gan, B)
            R_src = roi_feat_src.shape[0]
            R_gan = roi_feat_gan.shape[0]
            R_all = R_src + R_gan
            tr_loss = min(_round_up(max(R_src, 1), 8), 1024)
            rows_loss = _round_up(R_src, tr_loss)
            Rp = max(_round_up(R_all, 8), rows_loss)
            roi_feat_all = jnp.concatenate([roi_feat_src, roi_feat_gan], axis=0)
            if Rp != R_all:
                roi_feat_all = jnp.pad(roi_feat_all, ((0, Rp - R_all), (0, 0)))
            slab2 = self._run_rcnn(roi_feat_all, _pick_row_tile(Rp))

            x_fea = slab2[:R_src, :self.fc_dim]
            x_fea_gan = slab2[R_src:R_all, :self.fc_dim]
            x_cluster_fea, x_center_cluster = self._compute_cluster_targets(
                rois, x_fea, inputs['cluster_num'], inputs['threshold'])
            x_cluster_fea_gan, x_center_cluster_gan = \
                self._compute_cluster_targets(proposals_gan, x_fea_gan,
                                              inputs['cluster_num'],
                                              inputs['threshold'])

            rcnn_tgt_padded = self._pad_rcnn_targets(rcnn_tgt, rows_loss)
            rcnn_loss_cls, rcnn_loss_loc, rcnn_acc = self._add_rcnn_loss(
                slab2, rcnn_tgt_padded, tr_loss, R_src)

            outputs['losses'] = [rpn_loss_cls, rpn_loss_loc,
                                 rcnn_loss_cls, rcnn_loss_loc]
            outputs['accuracy'] = [rpn_acc, rcnn_acc]
            outputs['predict'] = [proposals]
            if x_fea_gan.shape[0] != 512:
                outputs['cluster_features'] = [x_cluster_fea, x_cluster_fea]
                outputs['cluster_centers'] = [x_center_cluster,
                                              x_center_cluster]
            else:
                outputs['cluster_features'] = [x_cluster_fea, x_cluster_fea_gan]
                outputs['cluster_centers'] = [x_center_cluster,
                                              x_center_cluster_gan]
        else:
            x_cm, hwp = self._to_channel_major(x_input)
            slab, pooled_sum = self._run_backbone_rpn(x_cm)
            pooled_mean = pooled_sum / float(hw)
            proposals = self._compute_rpn_proposals(slab, dims,
                                                    num_rois)[:, :5]
            assert proposals.shape[1] == 5
            roi_feat = self._roi_features(pooled_mean, proposals, 0)
            R = roi_feat.shape[0]
            Rp = _round_up(R, 8)
            if Rp != R:
                roi_feat = jnp.pad(roi_feat, ((0, Rp - R), (0, 0)))
            slab2 = self._run_rcnn(roi_feat, _pick_row_tile(Rp))
            rcnn_probs = slab2[:R, self.c_prob:self.c_prob + NC]
            rcnn_loc = slab2[:R, self.c_loc:self.c_loc + 4 * NC]
            # TODO(synk): compute_predicted_bboxes (decode + NMS) is external;
            # return raw (proposals, class probs, loc deltas) instead.
            bboxes = (proposals, rcnn_probs, rcnn_loc)
            outputs['predict'] = [proposals, bboxes]
        return outputs


# ----------------------------------------------------------------------------
if __name__ == "__main__":
    key = jax.random.PRNGKey(0)
    k_model, k_img, k_tgt = jax.random.split(key, 3)

    model = FasterRCNNAdExPallas(k_model)

    B, C, H, W = 2, 3, 16, 16
    image = jax.random.normal(k_img, (B, C, H, W), jnp.float32)
    target_image = jax.random.normal(k_tgt, (B, C, H, W), jnp.float32)

    inputs = {
        'cfg': {},
        'image': image,
        'ground_truth_bboxes': None,   # only consumed by external target fns
        'image_info': jnp.array([[H, W, 1.0]] * B, jnp.float32),
        'ignore_regions': None,
        'cluster_num': 4,
        'threshold': 0.5,
    }

    outputs = model.forward(inputs, target=target_image)

    for v in outputs['losses'] + outputs['accuracy']:
        jax.block_until_ready(v)
    jax.block_until_ready(outputs['predict'][0])
    for v in outputs['cluster_features'] + outputs['cluster_centers']:
        jax.block_until_ready(v)

    print("KERNEL_OK")
</pallas_src>

<mosaic_0001>
module attributes {stable_mosaic.version = 11 : i64} {
  func.func @_backbone_rpn_kernel(%arg0: i32, %arg1: i32, %arg2: memref<1x3x256xf32, #tpu.memory_space<vmem>>, %arg3: memref<32x3xf32, #tpu.memory_space<vmem>>, %arg4: memref<32x1xf32, #tpu.memory_space<vmem>>, %arg5: memref<24x32xbf16, #tpu.memory_space<vmem>>, %arg6: memref<24x1xf32, #tpu.memory_space<vmem>>, %arg7: memref<32x256xf32, #tpu.memory_space<vmem>>, %arg8: memref<1x32x1xf32, #tpu.memory_space<vmem>>) attributes {dimension_semantics = [#tpu.dimension_semantics<parallel>, #tpu.dimension_semantics<arbitrary>], iteration_bounds = array<i64: 4, 1>, scalar_prefetch = 0 : i64, scratch_operands = 0 : i64, tpu.core_type = #tpu.core_type<tc>, window_params = [{transform_indices = @transform_0, window_bounds = array<i64: 1, 3, 256>}, {pipeline_mode = #tpu.pipeline_mode<synchronous>, transform_indices = @transform_1, window_bounds = array<i64: 32, 3>}, {pipeline_mode = #tpu.pipeline_mode<synchronous>, transform_indices = @transform_2, window_bounds = array<i64: 32, 1>}, {pipeline_mode = #tpu.pipeline_mode<synchronous>, transform_indices = @transform_3, window_bounds = array<i64: 24, 32>}, {pipeline_mode = #tpu.pipeline_mode<synchronous>, transform_indices = @transform_4, window_bounds = array<i64: 24, 1>}, {transform_indices = @transform_5, window_bounds = array<i64: 32, 256>}, {transform_indices = @transform_6, window_bounds = array<i64: 1, 32, 1>}]} {
    %c0 = arith.constant 0 : index
    %c0_0 = arith.constant 0 : index
    %c0_1 = arith.constant 0 : index
    %0 = vector.load %arg2[%c0, %c0_0, %c0_1] : memref<1x3x256xf32, #tpu.memory_space<vmem>>, vector<1x3x256xf32>
    %1 = vector.shape_cast %0 : vector<1x3x256xf32> to vector<3x256xf32>
    %c0_2 = arith.constant 0 : index
    %c0_3 = arith.constant 0 : index
    %2 = vector.load %arg4[%c0_2, %c0_3] : memref<32x1xf32, #tpu.memory_space<vmem>>, vector<32x1xf32>
    %c0_4 = arith.constant 0 : index
    %c0_5 = arith.constant 0 : index
    %3 = vector.load %arg3[%c0_4, %c0_5] : memref<32x3xf32, #tpu.memory_space<vmem>>, vector<32x1xf32>
    %4 = vector.extract_strided_slice %1 {offsets = [0, 0], sizes = [1, 256], strides = [1, 1]} : vector<3x256xf32> to vector<1x256xf32>
    %5 = vector.broadcast %3 : vector<32x1xf32> to vector<32x256xf32>
    %6 = vector.broadcast %4 : vector<1x256xf32> to vector<32x256xf32>
    %7 = arith.mulf %5, %6 : vector<32x256xf32>
    %8 = vector.broadcast %2 : vector<32x1xf32> to vector<32x256xf32>
    %9 = arith.addf %8, %7 : vector<32x256xf32>
    %c0_6 = arith.constant 0 : index
    %c1 = arith.constant 1 : index
    %10 = vector.load %arg3[%c0_6, %c1] : memref<32x3xf32, #tpu.memory_space<vmem>>, vector<32x1xf32>
    %11 = vector.extract_strided_slice %1 {offsets = [1, 0], sizes = [1, 256], strides = [1, 1]} : vector<3x256xf32> to vector<1x256xf32>
    %12 = vector.broadcast %10 : vector<32x1xf32> to vector<32x256xf32>
    %13 = vector.broadcast %11 : vector<1x256xf32> to vector<32x256xf32>
    %14 = arith.mulf %12, %13 : vector<32x256xf32>
    %15 = arith.addf %9, %14 : vector<32x256xf32>
    %c0_7 = arith.constant 0 : index
    %c2 = arith.constant 2 : index
    %16 = vector.load %arg3[%c0_7, %c2] : memref<32x3xf32, #tpu.memory_space<vmem>>, vector<32x1xf32>
    %17 = vector.extract_strided_slice %1 {offsets = [2, 0], sizes = [1, 256], strides = [1, 1]} : vector<3x256xf32> to vector<1x256xf32>
    %18 = vector.broadcast %16 : vector<32x1xf32> to vector<32x256xf32>
    %19 = vector.broadcast %17 : vector<1x256xf32> to vector<32x256xf32>
    %20 = arith.mulf %18, %19 : vector<32x256xf32>
    %21 = arith.addf %15, %20 : vector<32x256xf32>
    %cst = arith.constant 0.000000e+00 : f32
    %22 = vector.broadcast %cst : f32 to vector<32x256xf32>
    %23 = arith.maximumf %21, %22 : vector<32x256xf32>
    %c0_8 = arith.constant 0 : index
    %c0_9 = arith.constant 0 : index
    %24 = vector.load %arg5[%c0_8, %c0_9] : memref<24x32xbf16, #tpu.memory_space<vmem>>, vector<24x32xbf16>
    %25 = arith.truncf %23 : vector<32x256xf32> to vector<32x256xbf16>
    %cst_10 = arith.constant dense<0.000000e+00> : vector<24x256xf32>
    %26 = tpu.matmul %24, %25, %cst_10 {dimension_numbers = #tpu.dot_dimension_numbers<[1], [0], [0], [1], [0, 0, 1, 1], [], []>} : vector<24x32xbf16>, vector<32x256xbf16>, vector<24x256xf32> -> vector<24x256xf32>
    %c0_11 = arith.constant 0 : index
    %c0_12 = arith.constant 0 : index
    %27 = vector.load %arg6[%c0_11, %c0_12] : memref<24x1xf32, #tpu.memory_space<vmem>>, vector<24x1xf32>
    %28 = vector.broadcast %27 : vector<24x1xf32> to vector<24x256xf32>
    %29 = arith.addf %26, %28 : vector<24x256xf32>
    %30 = vector.extract_strided_slice %29 {offsets = [0, 0], sizes = [4, 256], strides = [1, 1]} : vector<24x256xf32> to vector<4x256xf32>
    %31 = vector.extract_strided_slice %29 {offsets = [4, 0], sizes = [4, 256], strides = [1, 1]} : vector<24x256xf32> to vector<4x256xf32>
    %32 = arith.maximumf %30, %31 : vector<4x256xf32>
    %33 = arith.subf %30, %32 : vector<4x256xf32>
    %34 = math.exp %33 : vector<4x256xf32>
    %35 = arith.subf %31, %32 : vector<4x256xf32>
    %36 = math.exp %35 : vector<4x256xf32>
    %37 = arith.addf %34, %36 : vector<4x256xf32>
    %38 = arith.divf %36, %37 : vector<4x256xf32>
    %cst_13 = arith.constant 0.000000e+00 : f32
    %39 = vector.broadcast %cst_13 : f32 to vector<4x256xf32>
    %40 = tpu.concatenate %29, %38, %39 in 0 : vector<24x256xf32>, vector<4x256xf32>, vector<4x256xf32> -> vector<32x256xf32>
    %c0_14 = arith.constant 0 : index
    %c0_15 = arith.constant 0 : index
    %41 = vector.load %arg7[%c0_14, %c0_15] : memref<32x256xf32, #tpu.memory_space<vmem>>, vector<32x256xf32>
    tpu.vector_store %arg7[%c0_14, %c0_15], %40 {strides = array<i32>} : memref<32x256xf32, #tpu.memory_space<vmem>>, vector<32x256xf32>,
    %c0_i32 = arith.constant 0 : i32
    %42 = arith.cmpi eq, %arg1, %c0_i32 : i32
    %43 = arith.extui %42 : i1 to i32
    %c0_i32_16 = arith.constant 0 : i32
    %44 = arith.cmpi ne, %43, %c0_i32_16 : i32
    scf.if %44 {
      %cst_24 = arith.constant 0.000000e+00 : f32
      %53 = vector.broadcast %cst_24 : f32 to vector<32x1xf32>
      %c0_25 = arith.constant 0 : index
      %c0_26 = arith.constant 0 : index
      %c0_27 = arith.constant 0 : index
      %54 = vector.load %arg8[%c0_25, %c0_26, %c0_27] : memref<1x32x1xf32, #tpu.memory_space<vmem>>, vector<1x32x1xf32>
      %55 = vector.shape_cast %54 : vector<1x32x1xf32> to vector<32x1xf32>
      %56 = vector.shape_cast %53 : vector<32x1xf32> to vector<1x32x1xf32>
      tpu.vector_store %arg8[%c0_25, %c0_26, %c0_27], %56 {strides = array<i32>} : memref<1x32x1xf32, #tpu.memory_space<vmem>>, vector<1x32x1xf32>,
    } else {
    }
    %c0_17 = arith.constant 0 : index
    %c0_18 = arith.constant 0 : index
    %c0_19 = arith.constant 0 : index
    %45 = vector.load %arg8[%c0_17, %c0_18, %c0_19] : memref<1x32x1xf32, #tpu.memory_space<vmem>>, vector<1x32x1xf32>
    %46 = vector.shape_cast %45 : vector<1x32x1xf32> to vector<32x1xf32>
    %cst_20 = arith.constant dense<0.000000e+00> : vector<32xf32>
    %47 = vector.multi_reduction <add>, %23, %cst_20 [1] : vector<32x256xf32> to vector<32xf32>
    %48 = vector.shape_cast %47 : vector<32xf32> to vector<32x1xf32>
    %49 = arith.addf %46, %48 : vector<32x1xf32>
    %c0_21 = arith.constant 0 : index
    %c0_22 = arith.constant 0 : index
    %c0_23 = arith.constant 0 : index
    %50 = vector.load %arg8[%c0_21, %c0_22, %c0_23] : memref<1x32x1xf32, #tpu.memory_space<vmem>>, vector<1x32x1xf32>
    %51 = vector.shape_cast %50 : vector<1x32x1xf32> to vector<32x1xf32>
    %52 = vector.shape_cast %49 : vector<32x1xf32> to vector<1x32x1xf32>
    tpu.vector_store %arg8[%c0_21, %c0_22, %c0_23], %52 {strides = array<i32>} : memref<1x32x1xf32, #tpu.memory_space<vmem>>, vector<1x32x1xf32>,
    return
  }
  func.func @transform_0(%arg0: i32, %arg1: i32) -> (i32, i32, i32) {
    %c0_i32 = arith.constant 0 : i32
    %c0_i32_0 = arith.constant 0 : i32
    return %arg0, %c0_i32, %arg1 : i32, i32, i32
  }
  func.func @transform_1(%arg0: i32, %arg1: i32) -> (i32, i32) {
    %c0_i32 = arith.constant 0 : i32
    %c0_i32_0 = arith.constant 0 : i32
    %c0_i32_1 = arith.constant 0 : i32
    return %c0_i32, %c0_i32_0 : i32, i32
  }
  func.func @transform_2(%arg0: i32, %arg1: i32) -> (i32, i32) {
    %c0_i32 = arith.constant 0 : i32
    %c0_i32_0 = arith.constant 0 : i32
    %c0_i32_1 = arith.constant 0 : i32
    return %c0_i32, %c0_i32_0 : i32, i32
  }
  func.func @transform_3(%arg0: i32, %arg1: i32) -> (i32, i32) {
    %c0_i32 = arith.constant 0 : i32
    %c0_i32_0 = arith.constant 0 : i32
    %c0_i32_1 = arith.constant 0 : i32
    return %c0_i32, %c0_i32_0 : i32, i32
  }
  func.func @transform_4(%arg0: i32, %arg1: i32) -> (i32, i32) {
    %c0_i32 = arith.constant 0 : i32
    %c0_i32_0 = arith.constant 0 : i32
    %c0_i32_1 = arith.constant 0 : i32
    return %c0_i32, %c0_i32_0 : i32, i32
  }
  func.func @transform_5(%arg0: i32, %arg1: i32) -> (i32, i32) {
    %c1_i32 = arith.constant 1 : i32
    %0 = arith.muli %arg0, %c1_i32 : i32
    %1 = arith.addi %0, %arg1 : i32
    %c0_i32 = arith.constant 0 : i32
    %c0_i32_0 = arith.constant 0 : i32
    return %c0_i32, %1 : i32, i32
  }
  func.func @transform_6(%arg0: i32, %arg1: i32) -> (i32, i32, i32) {
    %c0_i32 = arith.constant 0 : i32
    %c0_i32_0 = arith.constant 0 : i32
    %c0_i32_1 = arith.constant 0 : i32
    return %arg0, %c0_i32, %c0_i32_0 : i32, i32, i32
  }
}

</mosaic_0001>

<llo_original>
// kernel: tpu_custom_call.1
$region0: #{tpu_custom_call.1}
  #allocation0 [shape = 'u32[]', space=smem, size = 0x4, offset = 0x4, fixed_abs, tag = 'smem constant byte address 0x4 - core index']
  #allocation1 [shape = 'u32[72,128]{1,0:T(1,128)}', space=vmem, size = 0x9000, scoped, tag = 'internal scratch']
  %s0 = inlined_call_operand.vmem [shape: f32[4,3,256], index: 0, kind: input, shape index: {}]
  %s1 = inlined_call_operand.vmem [shape: f32[32,3], index: 1, kind: input, shape index: {}]
  %s2 = inlined_call_operand.vmem [shape: f32[32,1], index: 2, kind: input, shape index: {}]
  %s3 = inlined_call_operand.vmem [shape: bf16[24,32], index: 3, kind: input, shape index: {}]
  %s4 = inlined_call_operand.vmem [shape: f32[24,1], index: 4, kind: input, shape index: {}]
  %s5 = inlined_call_operand.hbm [shape: f32[32,1024], index: 5, kind: output, shape index: {0}]
  %s6 = inlined_call_operand.vmem [shape: f32[4,32,1], index: 6, kind: output, shape index: {1}]
  %7 = xla_tuple %s5, %s6
  %s8 = sld [smem:[#allocation0]]
  $region65: #{tpu_custom_call.1} parent=0
    _
  %s10 = ssub.s32 1, %s8
  %s11 = scalar_select 0, %s10, %s8
  $region1: #{tpu_custom_call.1} parent=0
    #allocation2 [shape = 'u8[65536]{0}', space=vmem, size = 0x10000, scoped, tag = 'output window, operand 0']
    #allocation3 [shape = 's32[2]{0}', space=sflag, size = 0x8, scoped, tag = 'scoped memory for tpu_custom_call.1']
    %12 = vsyncpa [#allocation3], 0
    %s13 = scalar_lea.sflag [#allocation3], 1
    %14 = vsyncpa %s13, 0
    loop: start=0, step=1, limit=6
    $region2: #{tpu_custom_call.1} parent=1 // loop_pre_header
      _
    $region3: #{tpu_custom_call.1} parent=1 // loop_header
      %s16 = sphi 0, %s20
      %p17 = scmp.ge.s32.totalorder %s16, 6
      %s23 = sphi 0, %s35
      %s24 = sphi 0, %s31
      %s25 = sphi 0, %s23
      %s26 = sphi 0, %s24
      %s27 = sphi 0, %s25
      %s28 = sphi 0, %s26
      %s40 = sphi 0, %s42
      %s43 = sphi 0, %s40
      %s44 = sphi 0, %s43
      %s60 = sphi 0, %s44
      %s64 = sphi 0, %s64
      %s66 = sphi 0, %s64
      %s67 = sphi 0, %s66
      %s81 = sphi 0, %s67
      %s85 = sphi 0, %s85
      %s87 = sphi 0, %s85
      %s88 = sphi 0, %s87
      %s102 = sphi 0, %s88
      %s106 = sphi 0, %s106
      %s108 = sphi 0, %s106
      %s109 = sphi 0, %s108
      %s123 = sphi 0, %s109
      %s127 = sphi 0, %s127
      %s129 = sphi 0, %s127
      %s130 = sphi 0, %s129
      %s144 = sphi 0, %s130
      %s152 = sphi 0, %s154
      %s155 = sphi 0, %s152
      %s156 = sphi 0, %s155
      %s172 = sphi 0, %s156
      %s178 = sphi 0, %s180
      %s181 = sphi 0, %s178
      %s182 = sphi 0, %s181
      %s198 = sphi 0, %s182
    $region4: #{tpu_custom_call.1} parent=1 // loop_header_branch
      %19 = sbr.rel (%p17) target = $region8
    $region5: #{tpu_custom_call.1} parent=1 // loop_body
      %s21 = ssub.s32 %s16, 1
      %s22 = ssub.s32 %s16, 2
      %s29 = sadd.s32 1, %s24
      %p30 = scmp.ge.s32.totalorder %s29, 1
      %s31 = scalar_select %p30, 0, %s29
      %s32 = sadd.s32 1, %s23
      %s33 = scalar_select %p30, %s32, %s23
      %p34 = scmp.ge.s32.totalorder %s33, 4
      %s35 = scalar_select %p34, 0, %s33
      %s36 = ssub.s32 %s23, %s35
      %s37 = ssub.s32 %s24, %s31
      %s38 = sor.u32 %s36, %s37
      %p39 = scmp.eq.s32.totalorder %s38, 0
      %s41 = sadd.s32 %s40, 1
      %s42 = scalar_select %p39, %s40, %s41
      %p45 = pneg %p39
      %p46 = scmp.eq.s32.totalorder %s16, 3
      %p47 = por %p45, %p46
      %p48 = scmp.ne.s32.totalorder %s40, %s43
      %p49 = scmp.eq.s32.totalorder %s16, 0
      %p50 = por %p48, %p49
      %p51 = scmp.ne.s32.totalorder %s40, %s43
      %p52 = scmp.eq.s32.totalorder %s21, 3
      %p53 = por %p51, %p52
      %p54 = scmp.ne.s32.totalorder %s43, %s44
      %p55 = scmp.eq.s32.totalorder %s21, 0
      %p56 = por %p54, %p55
      %p57 = scmp.ne.s32.totalorder %s43, %s44
      %p58 = scmp.eq.s32.totalorder %s22, 3
      %p59 = por %p57, %p58
      %p61 = scmp.ne.s32.totalorder %s44, %s60
      %p62 = scmp.eq.s32.totalorder %s22, 0
      %p63 = por %p61, %p62
      %s65 = sadd.s32 %s64, 1
      %p68 = scmp.eq.s32.totalorder %s16, 3
      %p69 = scmp.ne.s32.totalorder %s64, %s66
      %p70 = scmp.eq.s32.totalorder %s16, 0
      %p71 = por %p69, %p70
      %p72 = scmp.ne.s32.totalorder %s64, %s66
      %p73 = scmp.eq.s32.totalorder %s21, 3
      %p74 = por %p72, %p73
      %p75 = scmp.ne.s32.totalorder %s66, %s67
      %p76 = scmp.eq.s32.totalorder %s21, 0
      %p77 = por %p75, %p76
      %p78 = scmp.ne.s32.totalorder %s66, %s67
      %p79 = scmp.eq.s32.totalorder %s22, 3
      %p80 = por %p78, %p79
      %p82 = scmp.ne.s32.totalorder %s67, %s81
      %p83 = scmp.eq.s32.totalorder %s22, 0
      %p84 = por %p82, %p83
      %s86 = sadd.s32 %s85, 1
      %p89 = scmp.eq.s32.totalorder %s16, 3
      %p90 = scmp.ne.s32.totalorder %s85, %s87
      %p91 = scmp.eq.s32.totalorder %s16, 0
      %p92 = por %p90, %p91
      %p93 = scmp.ne.s32.totalorder %s85, %s87
      %p94 = scmp.eq.s32.totalorder %s21, 3
      %p95 = por %p93, %p94
      %p96 = scmp.ne.s32.totalorder %s87, %s88
      %p97 = scmp.eq.s32.totalorder %s21, 0
      %p98 = por %p96, %p97
      %p99 = scmp.ne.s32.totalorder %s87, %s88
      %p100 = scmp.eq.s32.totalorder %s22, 3
      %p101 = por %p99, %p100
      %p103 = scmp.ne.s32.totalorder %s88, %s102
      %p104 = scmp.eq.s32.totalorder %s22, 0
      %p105 = por %p103, %p104
      %s107 = sadd.s32 %s106, 1
      %p110 = scmp.eq.s32.totalorder %s16, 3
      %p111 = scmp.ne.s32.totalorder %s106, %s108
      %p112 = scmp.eq.s32.totalorder %s16, 0
      %p113 = por %p111, %p112
      %p114 = scmp.ne.s32.totalorder %s106, %s108
      %p115 = scmp.eq.s32.totalorder %s21, 3
      %p116 = por %p114, %p115
      %p117 = scmp.ne.s32.totalorder %s108, %s109
      %p118 = scmp.eq.s32.totalorder %s21, 0
      %p119 = por %p117, %p118
      %p120 = scmp.ne.s32.totalorder %s108, %s109
      %p121 = scmp.eq.s32.totalorder %s22, 3
      %p122 = por %p120, %p121
      %p124 = scmp.ne.s32.totalorder %s109, %s123
      %p125 = scmp.eq.s32.totalorder %s22, 0
      %p126 = por %p124, %p125
      %s128 = sadd.s32 %s127, 1
      %p131 = scmp.eq.s32.totalorder %s16, 3
      %p132 = scmp.ne.s32.totalorder %s127, %s129
      %p133 = scmp.eq.s32.totalorder %s16, 0
      %p134 = por %p132, %p133
      %p135 = scmp.ne.s32.totalorder %s127, %s129
      %p136 = scmp.eq.s32.totalorder %s21, 3
      %p137 = por %p135, %p136
      %p138 = scmp.ne.s32.totalorder %s129, %s130
      %p139 = scmp.eq.s32.totalorder %s21, 0
      %p140 = por %p138, %p139
      %p141 = scmp.ne.s32.totalorder %s129, %s130
      %p142 = scmp.eq.s32.totalorder %s22, 3
      %p143 = por %p141, %p142
      %p145 = scmp.ne.s32.totalorder %s130, %s144
      %p146 = scmp.eq.s32.totalorder %s22, 0
      %p147 = por %p145, %p146
      %s148 = sadd.s32 %s23, %s24
      %s149 = sadd.s32 %s35, %s31
      %s150 = ssub.s32 %s148, %s149
      %p151 = scmp.eq.s32.totalorder %s150, 0
      %s153 = sadd.s32 %s152, 1
      %s154 = scalar_select %p151, %s152, %s153
      %p157 = pneg %p151
      %p158 = scmp.eq.s32.totalorder %s16, 3
      %p159 = por %p157, %p158
      %p160 = scmp.ne.s32.totalorder %s152, %s155
      %p161 = scmp.eq.s32.totalorder %s16, 0
      %p162 = por %p160, %p161
      %p163 = scmp.ne.s32.totalorder %s152, %s155
      %p164 = scmp.eq.s32.totalorder %s21, 3
      %p165 = por %p163, %p164
      %p166 = scmp.ne.s32.totalorder %s155, %s156
      %p167 = scmp.eq.s32.totalorder %s21, 0
      %p168 = por %p166, %p167
      %p169 = scmp.ne.s32.totalorder %s155, %s156
      %p170 = scmp.eq.s32.totalorder %s22, 3
      %p171 = por %p169, %p170
      %p173 = scmp.ne.s32.totalorder %s156, %s172
      %p174 = scmp.eq.s32.totalorder %s22, 0
      %p175 = por %p173, %p174
      %s176 = ssub.s32 %s23, %s35
      %p177 = scmp.eq.s32.totalorder %s176, 0
      %s179 = sadd.s32 %s178, 1
      %s180 = scalar_select %p177, %s178, %s179
      %p183 = pneg %p177
      %p184 = scmp.eq.s32.totalorder %s16, 3
      %p185 = por %p183, %p184
      %p186 = scmp.ne.s32.totalorder %s178, %s181
      %p187 = scmp.eq.s32.totalorder %s16, 0
      %p188 = por %p186, %p187
      %p189 = scmp.ne.s32.totalorder %s178, %s181
      %p190 = scmp.eq.s32.totalorder %s21, 3
      %p191 = por %p189, %p190
      %p192 = scmp.ne.s32.totalorder %s181, %s182
      %p193 = scmp.eq.s32.totalorder %s21, 0
      %p194 = por %p192, %p193
      %p195 = scmp.ne.s32.totalorder %s181, %s182
      %p196 = scmp.eq.s32.totalorder %s22, 3
      %p197 = por %p195, %p196
      %p199 = scmp.ne.s32.totalorder %s182, %s198
      %p200 = scmp.eq.s32.totalorder %s22, 0
      %p201 = por %p199, %p200
      %p202 = scmp.le.s32.totalorder 1, %s16
      %p203 = scmp.lt.s32.totalorder %s16, 5
      %p204 = pnand %p202, %p203
      %p205 = pneg %p204
      // Predicated region
      $region9: #{tpu_custom_call.1} parent=5 // pred_check
        _
      $region10: #{tpu_custom_call.1} parent=5 // pred_check_branch
        %207 = sbr.rel (%p204) target = $region12
      $region11: #{tpu_custom_call.1} parent=5 // pred_region
        %s208 = ssub.s32 %s16, 1
        // Predicated region
        $region13: #{tpu_custom_call.1} parent=11 // pred_check
          %p209 = pneg %p77
        $region14: #{tpu_custom_call.1} parent=11 // pred_check_branch
          %211 = sbr.rel (%p209) target = $region16
        $region15: #{tpu_custom_call.1} parent=11 // pred_region
          _
        $region16: #{tpu_custom_call.1} parent=11 // pred_fallthru
          _
        // Predicated region
        $region17: #{tpu_custom_call.1} parent=11 // pred_check
          %p212 = pneg %p98
        $region18: #{tpu_custom_call.1} parent=11 // pred_check_branch
          %214 = sbr.rel (%p212) target = $region20
        $region19: #{tpu_custom_call.1} parent=11 // pred_region
          _
        $region20: #{tpu_custom_call.1} parent=11 // pred_fallthru
          _
        // Predicated region
        $region21: #{tpu_custom_call.1} parent=11 // pred_check
          %p215 = pneg %p119
        $region22: #{tpu_custom_call.1} parent=11 // pred_check_branch
          %217 = sbr.rel (%p215) target = $region24
        $region23: #{tpu_custom_call.1} parent=11 // pred_region
          _
        $region24: #{tpu_custom_call.1} parent=11 // pred_fallthru
          _
        // Predicated region
        $region25: #{tpu_custom_call.1} parent=11 // pred_check
          %p218 = pneg %p140
        $region26: #{tpu_custom_call.1} parent=11 // pred_check_branch
          %220 = sbr.rel (%p218) target = $region28
        $region27: #{tpu_custom_call.1} parent=11 // pred_region
          _
        $region28: #{tpu_custom_call.1} parent=11 // pred_fallthru
          _
      $region12: #{tpu_custom_call.1} parent=5 // pred_fallthru
        _
      %p221 = scmp.lt.s32.totalorder %s16, 4
      // Predicated region
      $region29: #{tpu_custom_call.1} parent=5 // pred_check
        %p222 = pneg %p221
      $region30: #{tpu_custom_call.1} parent=5 // pred_check_branch
        %224 = sbr.rel (%p222) target = $region32
      $region31: #{tpu_custom_call.1} parent=5 // pred_region
        // Predicated region
        $region33: #{tpu_custom_call.1} parent=31 // pred_check
          %p225 = pneg %p50
        $region34: #{tpu_custom_call.1} parent=31 // pred_check_branch
          %227 = sbr.rel (%p225) target = $region36
        $region35: #{tpu_custom_call.1} parent=31 // pred_region
          %s228 = smul.u32 2, %s24
          %p229 = scmp.lt.s32.totalorder %s23, 3
          %s230 = scalar_select %p229, %s23, 3
          %p231 = scmp.lt.s32.totalorder %s228, 1
          %s232 = scalar_select %p231, %s228, 1
          %s233 = smul.addr %s230, 2
          %s234 = sadd.s32 %s232, %s233
          %s235 = smul.addr %s234, 4
          %s236 = scalar_lea.vmem %s0, %s235
          %s237 = smul.u32 2, %s24
        $region36: #{tpu_custom_call.1} parent=31 // pred_fallthru
          _
      $region32: #{tpu_custom_call.1} parent=5 // pred_fallthru
        _
      %p238 = scmp.le.s32.totalorder 1, %s16
      %p239 = scmp.lt.s32.totalorder %s16, 5
      %p240 = pnand %p238, %p239
      %p241 = pneg %p240
      // Predicated region
      $region37: #{tpu_custom_call.1} parent=5 // pred_check
        _
      $region38: #{tpu_custom_call.1} parent=5 // pred_check_branch
        %243 = sbr.rel (%p240) target = $region40
      $region39: #{tpu_custom_call.1} parent=5 // pred_region
        %s244 = ssub.s32 %s16, 1
        %s245 = smul.u32 2, %s26
        %p246 = scmp.lt.s32.totalorder %s25, 3
        %s247 = scalar_select %p246, %s25, 3
        %p248 = scmp.lt.s32.totalorder %s245, 1
        %s249 = scalar_select %p248, %s245, 1
        %s250 = smul.addr %s247, 2
        %s251 = sadd.s32 %s249, %s250
        %s252 = smul.addr %s251, 4
        %s253 = scalar_lea.vmem %s0, %s252
        %p254 = pneg %p56
        %p255 = pneg %p53
        %p256 = pneg %p77
        %p257 = pneg %p74
        %p258 = pneg %p98
        %p259 = pneg %p95
        %p260 = pneg %p119
        %p261 = pneg %p116
        %p262 = pneg %p140
        %p263 = pneg %p137
        %p264 = pneg %p168
        %p265 = pneg %p165
        %s266 = sand.u32 %s155, 1
        %s267 = scalar_lea.sflag [#allocation3], %s266
        %s268 = sand.u32 %s155, 1
        %s269 = smul.addr %s268, 64
        %s270 = scalar_lea.vmem [#allocation2], %s269
        %p271 = pneg %p194
        %p272 = pneg %p191
        %p273 = scmp.lt.s32.totalorder %s25, 3
        %s274 = scalar_select %p273, %s25, 3
        %s275 = smul.addr %s274, 4
        %s276 = smul.addr %s275, 8
        %s277 = scalar_lea.vmem %s6, %s276
        %s278 = smul.u32 2, %s26
        %p279 = scmp.lt.s32.totalorder %s25, 3
        %s280 = scalar_select %p279, %s25, 3
        %p281 = scmp.lt.s32.totalorder %s278, 1
        %s282 = scalar_select %p281, %s278, 1
        %s283 = smul.addr %s280, 2
        %s284 = sadd.s32 %s282, %s283
        %s285 = smul.addr %s284, 4
        %s286 = scalar_lea.vmem %s0, %s285
        %s287 = smul.u32 2, %s26
        %s288 = sadd.s32 %s25, %s26
        %s289 = smul.u32 2, %s288
        %p290 = scmp.lt.s32.totalorder %s25, 3
        %s291 = scalar_select %p290, %s25, 3
        %s292 = smul.addr %s291, 4
        %s293 = smul.addr %s292, 8
        %s294 = scalar_lea.vmem %s6, %s293
        %v296 = vld [vmem:[%s286] sm:$0x77]
        %v297 = vld [vmem:[%s2] sm:$0xff]
        %v298 = vld [vmem:[%s2 + $0x8] sm:$0xff]
        %v299 = vld [vmem:[%s2 + $0x10] sm:$0xff]
        %v300 = vld [vmem:[%s2 + $0x18] sm:$0xff]
        %v301 = vld [vmem:[%s1] sm:$0xff]
        %v302 = vld [vmem:[%s1 + $0x8] sm:$0xff]
        %v303 = vld [vmem:[%s1 + $0x10] sm:$0xff]
        %v304 = vld [vmem:[%s1 + $0x18] sm:$0xff]
        %306 = vset.pattern.permute.xlu0 0
        %307 = vperm.xlu0 %306, %v301
        %v308 = vpop.permute.xlu0 %307
        %311 = vset.pattern.permute.xlu0 0
        %312 = vperm.xlu0 %311, %v302
        %v313 = vpop.permute.xlu0 %312
        %316 = vset.pattern.permute.xlu0 0
        %317 = vperm.xlu0 %316, %v303
        %v318 = vpop.permute.xlu0 %317
        %321 = vset.pattern.permute.xlu0 0
        %322 = vperm.xlu0 %321, %v304
        %v323 = vpop.permute.xlu0 %322
        %v326 = vperm.slane %v296, 0
        %v327 = vperm.slane %v296, 4
        %v330 = vperm.slane %v326, 0
        %v331 = vperm.slane %v327, 0
        %v332 = vmul.f32 %v308, %v330
        %v333 = vmul.f32 %v308, %v331
        %v334 = vmul.f32 %v313, %v330
        %v335 = vmul.f32 %v313, %v331
        %v336 = vmul.f32 %v318, %v330
        %v337 = vmul.f32 %v318, %v331
        %v338 = vmul.f32 %v323, %v330
        %v339 = vmul.f32 %v323, %v331
        %341 = vset.pattern.permute.xlu0 0
        %342 = vperm.xlu0 %341, %v297
        %v343 = vpop.permute.xlu0 %342
        %346 = vset.pattern.permute.xlu0 0
        %347 = vperm.xlu0 %346, %v298
        %v348 = vpop.permute.xlu0 %347
        %351 = vset.pattern.permute.xlu0 0
        %352 = vperm.xlu0 %351, %v299
        %v353 = vpop.permute.xlu0 %352
        %356 = vset.pattern.permute.xlu0 0
        %357 = vperm.xlu0 %356, %v300
        %v358 = vpop.permute.xlu0 %357
        %v360 = vadd.f32 %v343, %v332
        %v361 = vadd.f32 %v343, %v333
        %v362 = vadd.f32 %v348, %v334
        %v363 = vadd.f32 %v348, %v335
        %v364 = vadd.f32 %v353, %v336
        %v365 = vadd.f32 %v353, %v337
        %v366 = vadd.f32 %v358, %v338
        %v367 = vadd.f32 %v358, %v339
        %368 = vset.pattern.permute.xlu0 1
        %369 = vperm.xlu0 %368, %v301
        %v370 = vpop.permute.xlu0 %369
        %372 = vset.pattern.permute.xlu0 1
        %373 = vperm.xlu0 %372, %v302
        %v374 = vpop.permute.xlu0 %373
        %376 = vset.pattern.permute.xlu0 1
        %377 = vperm.xlu0 %376, %v303
        %v378 = vpop.permute.xlu0 %377
        %380 = vset.pattern.permute.xlu0 1
        %381 = vperm.xlu0 %380, %v304
        %v382 = vpop.permute.xlu0 %381
        %v384 = vperm.slane %v296, 1
        %v385 = vperm.slane %v296, 5
        %v388 = vperm.slane %v384, 1
        %v389 = vperm.slane %v385, 1
        %v390 = vmul.f32 %v370, %v388
        %v391 = vmul.f32 %v370, %v389
        %v392 = vmul.f32 %v374, %v388
        %v393 = vmul.f32 %v374, %v389
        %v394 = vmul.f32 %v378, %v388
        %v395 = vmul.f32 %v378, %v389
        %v396 = vmul.f32 %v382, %v388
        %v397 = vmul.f32 %v382, %v389
        %v398 = vadd.f32 %v360, %v390
        %v399 = vadd.f32 %v361, %v391
        %v400 = vadd.f32 %v362, %v392
        %v401 = vadd.f32 %v363, %v393
        %v402 = vadd.f32 %v364, %v394
        %v403 = vadd.f32 %v365, %v395
        %v404 = vadd.f32 %v366, %v396
        %v405 = vadd.f32 %v367, %v397
        %406 = vset.pattern.permute.xlu0 2
        %407 = vperm.xlu0 %406, %v301
        %v408 = vpop.permute.xlu0 %407
        %410 = vset.pattern.permute.xlu0 2
        %411 = vperm.xlu0 %410, %v302
        %v412 = vpop.permute.xlu0 %411
        %414 = vset.pattern.permute.xlu0 2
        %415 = vperm.xlu0 %414, %v303
        %v416 = vpop.permute.xlu0 %415
        %418 = vset.pattern.permute.xlu0 2
        %419 = vperm.xlu0 %418, %v304
        %v420 = vpop.permute.xlu0 %419
        %v422 = vperm.slane %v296, 2
        %v423 = vperm.slane %v296, 6
        %v426 = vperm.slane %v422, 2
        %v427 = vperm.slane %v423, 2
        %v428 = vmul.f32 %v408, %v426
        %v429 = vmul.f32 %v408, %v427
        %v430 = vmul.f32 %v412, %v426
        %v431 = vmul.f32 %v412, %v427
        %v432 = vmul.f32 %v416, %v426
        %v433 = vmul.f32 %v416, %v427
        %v434 = vmul.f32 %v420, %v426
        %v435 = vmul.f32 %v420, %v427
        %v436 = vadd.f32 %v398, %v428
        %v437 = vadd.f32 %v399, %v429
        %v438 = vadd.f32 %v400, %v430
        %v439 = vadd.f32 %v401, %v431
        %v440 = vadd.f32 %v402, %v432
        %v441 = vadd.f32 %v403, %v433
        %v442 = vadd.f32 %v404, %v434
        %v443 = vadd.f32 %v405, %v435
        %v444 = vmax.f32 %v436, 0.0
        %v445 = vmax.f32 %v437, 0.0
        %v446 = vmax.f32 %v438, 0.0
        %v447 = vmax.f32 %v439, 0.0
        %v448 = vmax.f32 %v440, 0.0
        %v449 = vmax.f32 %v441, 0.0
        %v450 = vmax.f32 %v442, 0.0
        %v451 = vmax.f32 %v443, 0.0
        %v452 = vld [vmem:[%s3] sm:$0xf]
        %v453 = vld [vmem:[%s3 + $0x4] sm:$0xf]
        %v454 = vld [vmem:[%s3 + $0x8] sm:$0xf]
        %v455 = vpack.c.bf16 %v446, %v444
        %v456 = vpack.c.bf16 %v447, %v445
        %v457 = vpack.c.bf16 %v450, %v448
        %v458 = vpack.c.bf16 %v451, %v449
        %v459 = vld [vmem:[%s4] sm:$0xff]
        %v460 = vld [vmem:[%s4 + $0x8] sm:$0xff]
        %v461 = vld [vmem:[%s4 + $0x10] sm:$0xff]
        %463 = vset.pattern.permute.xlu0 0
        %464 = vperm.xlu0 %463, %v459
        %v465 = vpop.permute.xlu0 %464
        %468 = vset.pattern.permute.xlu0 0
        %469 = vperm.xlu0 %468, %v460
        %v470 = vpop.permute.xlu0 %469
        %473 = vset.pattern.permute.xlu0 0
        %474 = vperm.xlu0 %473, %v461
        %v475 = vpop.permute.xlu0 %474
        %v480 = vunpack.c.l.b16 %v452
        %v481 = vunpack.c.l.b16 %v453
        %v482 = vunpack.c.l.b16 %v454
        %v483 = vpack.c.b16 %v481, %v480
        %v484 = vpack.c.b16 %v482, %v482
        %vm485 = vcmask 261120
        %v487 = vsel %vm485, %v483, 0
        %v490 = vsel %vm485, %v484, 0
        %492 = vmatpush.bf16.msra.mxu0 0
        %493 = vmatpush.bf16.msra.mxu0 0
        %494 = vmatpush.bf16.msra.mxu0 0
        %495 = vmatpush.bf16.msra.mxu0 0
        %496 = vmatpush.bf16.msra.mxu0 0
        %497 = vmatpush.bf16.msra.mxu0 0
        %498 = vmatpush.bf16.msra.mxu0 %v457
        %499 = vmatpush.bf16.msra.mxu0 %v455
        %500 = vmatmul.bf16.gmra.mxu0 %v487
        %v501 = vpop.f32.mrf.mxu0
        %v502 = vadd.f32 %v465, %v501
        %v503 = vpop.f32.mrf.mxu0
        %v504 = vadd.f32 %v470, %v503
        %505 = vmatmul.bf16.gmra.mxu0 %v490
        %v506 = vpop.f32.mrf.mxu0
        %v507 = vadd.f32 %v475, %v506
        %v508 = vpop.f32.mrf.mxu0
        %509 = vdwg.mxu0
        %510 = vmatpush.bf16.msra.mxu0 0
        %511 = vmatpush.bf16.msra.mxu0 0
        %512 = vmatpush.bf16.msra.mxu0 0
        %513 = vmatpush.bf16.msra.mxu0 0
        %514 = vmatpush.bf16.msra.mxu0 0
        %515 = vmatpush.bf16.msra.mxu0 0
        %516 = vmatpush.bf16.msra.mxu0 %v458
        %517 = vmatpush.bf16.msra.mxu0 %v456
        %518 = vmatmul.bf16.gmra.mxu0 %v487
        %v519 = vpop.f32.mrf.mxu0
        %v520 = vadd.f32 %v465, %v519
        %v521 = vpop.f32.mrf.mxu0
        %v522 = vadd.f32 %v470, %v521
        %523 = vmatmul.bf16.gmra.mxu0 %v490
        %v524 = vpop.f32.mrf.mxu0
        %v525 = vadd.f32 %v475, %v524
        %v526 = vpop.f32.mrf.mxu0
        %527 = vdwg.mxu0
        %v530 = vrot.slane %v502, 4
        %v531 = vrot.slane %v520, 4
        %v534 = vmax.f32 %v502, %v530
        %v535 = vmax.f32 %v520, %v531
        %v536 = vsub.f32 %v502, %v534
        %v537 = vsub.f32 %v520, %v535
        %v538 = vmul.f32 %v536, 1.442695
        %v539 = vpow.pop %v538
        %v540 = vmul.f32 %v537, 1.442695
        %v541 = vpow.pop %v540
        %v544 = vrot.slane %v534, 4
        %v545 = vrot.slane %v535, 4
        %v548 = vsub.f32 %v502, %v544
        %v549 = vsub.f32 %v520, %v545
        %v550 = vmul.f32 %v548, 1.442695
        %v551 = vpow.pop %v550
        %v552 = vmul.f32 %v549, 1.442695
        %v553 = vpow.pop %v552
        %v556 = vrot.slane %v551, 4
        %v557 = vrot.slane %v553, 4
        %v560 = vadd.f32 %v539, %v556
        %v561 = vadd.f32 %v541, %v557
        %v564 = vrot.slane %v560, 4
        %v565 = vrot.slane %v561, 4
        %v568 = vrcp.pop %v564
        %v569 = vmul.f32 %v564, %v568
        %v570 = vsub.f32 1.0, %v569
        %v571 = vmul.f32 %v568, %v570
        %v572 = vadd.f32 %v568, %v571
        %vm573 = vweird.f32 %v564
        %vm574 = vweird.f32 %v568
        %vm575 = vmor %vm573, %vm574
        %v576 = vsel %vm575, %v568, %v572
        %v577 = vand.u32 2147483647, %v564
        %vm578 = vcmp.eq.f32.partialorder %v577, 8.507059e+37
        %v579 = vand.u32 %v564, 2147483648
        %v580 = vor.u32 1.1754944e-38, %v579
        %v581 = vsel %vm578, %v580, %v576
        %v582 = vmul.f32 %v551, %v581
        %v583 = vrcp.pop %v565
        %v584 = vmul.f32 %v565, %v583
        %v585 = vsub.f32 1.0, %v584
        %v586 = vmul.f32 %v583, %v585
        %v587 = vadd.f32 %v583, %v586
        %vm588 = vweird.f32 %v565
        %vm589 = vweird.f32 %v583
        %vm590 = vmor %vm588, %vm589
        %v591 = vsel %vm590, %v583, %v587
        %v592 = vand.u32 2147483647, %v565
        %vm593 = vcmp.eq.f32.partialorder %v592, 8.507059e+37
        %v594 = vand.u32 %v565, 2147483648
        %v595 = vor.u32 1.1754944e-38, %v594
        %v596 = vsel %vm593, %v595, %v591
        %v597 = vmul.f32 %v553, %v596
        %v600 = vrot.slane %v582, 4
        %v601 = vrot.slane %v597, 4
        %vm604 = vcmask 1043456
        %v605 = vsel %vm604, %v600, 0.0
        %v606 = vsel %vm604, %v601, 0.0
        %607 = vst [vmem:[%s270] sm:$0xff] %v502
        %608 = vst [vmem:[%s270 + $0x8] sm:$0xff] %v520
        %609 = vst [vmem:[%s270 + $0x10] sm:$0xff] %v504
        %610 = vst [vmem:[%s270 + $0x18] sm:$0xff] %v522
        %611 = vst [vmem:[%s270 + $0x20] sm:$0xff] %v507
        %612 = vst [vmem:[%s270 + $0x28] sm:$0xff] %v525
        %613 = vst [vmem:[%s270 + $0x30] sm:$0xff] %v605
        %614 = vst [vmem:[%s270 + $0x38] sm:$0xff] %v606
        %p615 = scmp.eq.s32.totalorder %s26, 0
        // Predicated region
        $region41: #{tpu_custom_call.1} parent=39 // pred_check
          %p616 = pneg %p615
        $region42: #{tpu_custom_call.1} parent=39 // pred_check_branch
          %618 = sbr.rel (%p616) target = $region44
        $region43: #{tpu_custom_call.1} parent=39 // pred_region
          %vm619 = vcmask 7168
          %620 = vst.msk [vmem:[%s294] sm:$0xff] %vm619, 0.0
          %621 = vst.msk [vmem:[%s294 + $0x8] sm:$0xff] %vm619, 0.0
          %622 = vst.msk [vmem:[%s294 + $0x10] sm:$0xff] %vm619, 0.0
          %623 = vst.msk [vmem:[%s294 + $0x18] sm:$0xff] %vm619, 0.0
        $region44: #{tpu_custom_call.1} parent=39 // pred_fallthru
          _
        %v624 = vld [vmem:[%s294] sm:$0xff]
        %v625 = vld [vmem:[%s294 + $0x8] sm:$0xff]
        %v626 = vld [vmem:[%s294 + $0x10] sm:$0xff]
        %v627 = vld [vmem:[%s294 + $0x18] sm:$0xff]
        %v628 = vadd.f32 %v444, %v445
        %629 = vadd.xlane.f32.xlu0 %v628
        %v630 = vpop.xlane.xlu0 %629
        %v631 = vadd.f32 %v446, %v447
        %632 = vadd.xlane.f32.xlu0 %v631
        %v633 = vpop.xlane.xlu0 %632
        %v634 = vadd.f32 %v448, %v449
        %635 = vadd.xlane.f32.xlu0 %v634
        %v636 = vpop.xlane.xlu0 %635
        %v637 = vadd.f32 %v450, %v451
        %638 = vadd.xlane.f32.xlu0 %v637
        %v639 = vpop.xlane.xlu0 %638
        %v640 = vadd.f32 %v624, %v630
        %v641 = vadd.f32 %v625, %v633
        %v642 = vadd.f32 %v626, %v636
        %v643 = vadd.f32 %v627, %v639
        %vm644 = vcmask 7168
        %645 = vst.msk [vmem:[%s294] sm:$0xff] %vm644, %v640
        %646 = vst.msk [vmem:[%s294 + $0x8] sm:$0xff] %vm644, %v641
        %647 = vst.msk [vmem:[%s294 + $0x10] sm:$0xff] %vm644, %v642
        %648 = vst.msk [vmem:[%s294 + $0x18] sm:$0xff] %vm644, %v643
        %s649 = sand.u32 %s155, 1
        %s650 = scalar_lea.sflag [#allocation3], %s649
        %s651 = sand.u32 %s155, 1
        %s652 = smul.addr %s651, 64
        %s653 = scalar_lea.vmem [#allocation2], %s652
        %p654 = scmp.lt.s32.totalorder %s25, 3
        %s655 = scalar_select %p654, %s25, 3
        %s656 = smul.addr %s655, 4
        %s657 = smul.addr %s656, 8
        %s658 = scalar_lea.vmem %s6, %s657
        // Predicated region
        $region45: #{tpu_custom_call.1} parent=39 // pred_check
          %p659 = pneg %p165
        $region46: #{tpu_custom_call.1} parent=39 // pred_check_branch
          %661 = sbr.rel (%p659) target = $region48
        $region47: #{tpu_custom_call.1} parent=39 // pred_region
          %s662 = sadd.s32 %s25, %s26
          %s663 = smul.u32 2, %s662
          %665 = vsyncadd %s650, 0
          %s666 = smul.addr %s663, 8
          %s667 = scalar_lea.hbm %s5, %s666
          %s668 = sshll.u32 %s653, 4
          %s669 = int_to_ptr.vmem [resolvable:$true] %s668
          %s670 = sshll.u32 %s667, 4
          %s671 = int_to_ptr.hbm [resolvable:$true] %s670
          %676 = dma.vmem_to_hbm [thread:$0]  %s669, 1024, %s671, %s650, 256, 1024, 16
        $region48: #{tpu_custom_call.1} parent=39 // pred_fallthru
          _
        // Predicated region
        $region49: #{tpu_custom_call.1} parent=39 // pred_check
          %p677 = pneg %p191
        $region50: #{tpu_custom_call.1} parent=39 // pred_check_branch
          %679 = sbr.rel (%p677) target = $region52
        $region51: #{tpu_custom_call.1} parent=39 // pred_region
          _
        $region52: #{tpu_custom_call.1} parent=39 // pred_fallthru
          _
      $region40: #{tpu_custom_call.1} parent=5 // pred_fallthru
        _
      %p680 = scmp.le.s32.totalorder 2, %s16
      // Predicated region
      $region53: #{tpu_custom_call.1} parent=5 // pred_check
        %p681 = pneg %p680
      $region54: #{tpu_custom_call.1} parent=5 // pred_check_branch
        %683 = sbr.rel (%p681) target = $region56
      $region55: #{tpu_custom_call.1} parent=5 // pred_region
        %s684 = ssub.s32 %s16, 2
        // Predicated region
        $region57: #{tpu_custom_call.1} parent=55 // pred_check
          %p685 = pneg %p171
        $region58: #{tpu_custom_call.1} parent=55 // pred_check_branch
          %687 = sbr.rel (%p685) target = $region60
        $region59: #{tpu_custom_call.1} parent=55 // pred_region
          %s688 = sand.u32 %s156, 1
          %s689 = scalar_lea.sflag [#allocation3], %s688
          %s690 = sand.u32 %s156, 1
          %s691 = smul.addr %s690, 64
          %s692 = scalar_lea.vmem [#allocation2], %s691
          %694 = dma.done %s689, 1024
        $region60: #{tpu_custom_call.1} parent=55 // pred_fallthru
          _
        // Predicated region
        $region61: #{tpu_custom_call.1} parent=55 // pred_check
          %p695 = pneg %p197
        $region62: #{tpu_custom_call.1} parent=55 // pred_check_branch
          %697 = sbr.rel (%p695) target = $region64
        $region63: #{tpu_custom_call.1} parent=55 // pred_region
          %p698 = scmp.lt.s32.totalorder %s27, 3
          %s699 = scalar_select %p698, %s27, 3
          %s700 = smul.addr %s699, 4
          %s701 = smul.addr %s700, 8
          %s702 = scalar_lea.vmem %s6, %s701
        $region64: #{tpu_custom_call.1} parent=55 // pred_fallthru
          _
      $region56: #{tpu_custom_call.1} parent=5 // pred_fallthru
        _
    $region6: #{tpu_custom_call.1} parent=1 // loop_footer
      %s20 = sadd.s32 1, %s16
    $region7: #{tpu_custom_call.1} parent=1 // loop_footer_branch
      %15 = sbr.rel target = $region3
    $region8: #{tpu_custom_call.1} parent=1 // loop_exit
      _
    %703 = vsyncpa [#allocation3], 1
    %s704 = scalar_lea.sflag [#allocation3], 1
    %705 = vsyncpa %s704, 1

</llo_original>
